<compile_context>
chip_gen: v7x
topology: tpu7x:2x2x1
jax: 0.10.0
libtpu: 0.0.40
codegen_flags: <defaults>
</compile_context>

<pallas_src>
import functools

import jax
import jax.numpy as jnp
from jax.experimental import pallas as pl
from jax.experimental.pallas import tpu as pltpu

IN_FEATURES = 256
OUT_FEATURES = 512
EPS = 1e-12            # F.normalize default eps
MAX_BATCH_TILE = 1024  # big tiles amortize the ~0.35us/step pipeline overhead
_TB_BUCKETS = (8, 16, 32, 64, 128, 256, 512, 1024)  # fixed buckets -> bounded #specializations


def _pick_tb(B, max_tb=MAX_BATCH_TILE):
    # Smallest fixed bucket that covers B in one step, capped at max_tb.
    tb = next((t for t in _TB_BUCKETS if t >= B), _TB_BUCKETS[-1])
    tb = min(tb, max_tb)
    # v7x has 2 TensorCores: ensure >= 2 grid steps when the batch is big enough so the
    # "parallel" axis actually shards across both cores (harmless on single-TC v5e/v6e).
    if B >= 16 and pl.cdiv(B, tb) < 2:
        tb = max(8, tb // 2)
    return tb


def header_kernel(x_ref, w_ref, o_ref, *, precision=None):
    # x_ref: (tb, 256) input tile; w_ref: (256, 512) resident weight (in, out).
    # Native-dtype operands on the MXU (bf16 fast path if inputs are bf16), f32 accumulate.
    y = jnp.dot(x_ref[...], w_ref[...],
                preferred_element_type=jnp.float32, precision=precision)
    # Row-wise L2 normalization (dim=1). rsqrt -> EUP; multiply instead of divide.
    sq = jnp.sum(y * y, axis=1, keepdims=True)
    inv = jax.lax.rsqrt(jnp.maximum(sq, EPS * EPS))  # == 1 / max(sqrt(sq), EPS)
    o_ref[...] = (y * inv).astype(o_ref.dtype)


def header_forward(x, w_t, *, out_dtype=None, precision=None, max_tb=MAX_BATCH_TILE):
    """x: (B, 256); w_t: (256, 512) = Linear weight transposed once at init.

    Any B works: the grid uses cdiv with a partial tail block (out-of-bounds writes are
    masked by Pallas; tail garbage reads never reach a written row). Pass bf16 x / w_t
    (and optionally out_dtype=jnp.bfloat16) to halve HBM traffic; accumulation is f32.
    """
    B, K = x.shape
    Kw, N = w_t.shape
    assert K == IN_FEATURES and Kw == IN_FEATURES and N == OUT_FEATURES
    out_dtype = x.dtype if out_dtype is None else out_dtype

    tb = _pick_tb(B, max_tb)
    grid = (pl.cdiv(B, tb),)

    return pl.pallas_call(
        functools.partial(header_kernel, precision=precision),
        out_shape=jax.ShapeDtypeStruct((B, N), out_dtype),
        grid_spec=pltpu.PrefetchScalarGridSpec(
            num_scalar_prefetch=0,
            grid=grid,
            in_specs=[
                pl.BlockSpec((tb, K), lambda i: (i, 0)),   # x tile, marches over batch
                pl.BlockSpec((K, N), lambda i: (0, 0)),    # full weight, resident in VMEM
            ],
            out_specs=pl.BlockSpec((tb, N), lambda i: (i, 0)),
        ),
        compiler_params=pltpu.CompilerParams(
            dimension_semantics=("parallel",),
        ),
    )(x, w_t)


def header_reference(x, w_t):
    y = jnp.asarray(x, jnp.float32) @ jnp.asarray(w_t, jnp.float32)
    norm = jnp.maximum(jnp.linalg.norm(y, axis=1, keepdims=True), EPS)
    return y / norm


if __name__ == "__main__":
    key = jax.random.PRNGKey(0)
    kx, kw, kx2 = jax.random.split(key, 3)

    # Deterministic init matching nn.Linear default: U(-1/sqrt(in), 1/sqrt(in)).
    bound = 1.0 / (IN_FEATURES ** 0.5)
    w = jax.random.uniform(
        kw, (OUT_FEATURES, IN_FEATURES), dtype=jnp.float32, minval=-bound, maxval=bound
    )
    w_t = jnp.asarray(w.T)  # transpose ONCE at model-init time -> (256, 512)

    # --- f32 path, small batch: single grid step (tb == 8). ---
    B = 8
    x = jax.random.normal(kx, (B, IN_FEATURES), dtype=jnp.float32)
    out = jax.block_until_ready(header_forward(x, w_t))
    ref = header_reference(x, w_t)
    assert out.shape == (B, OUT_FEATURES)
    # Default MXU precision is bf16-pass based on TPU; compare at a matching tolerance.
    assert jnp.allclose(out, ref, atol=2e-3, rtol=2e-3), "mismatch vs reference (B=8)"

    # --- f32 path, B not a multiple of the tile: 2 grid steps + masked partial tail. ---
    B2 = 20
    x2 = jax.random.normal(kx2, (B2, IN_FEATURES), dtype=jnp.float32)
    out2 = jax.block_until_ready(header_forward(x2, w_t))
    ref2 = header_reference(x2, w_t)
    assert out2.shape == (B2, OUT_FEATURES)
    assert jnp.all(jnp.isfinite(out2))
    assert jnp.allclose(out2, ref2, atol=2e-3, rtol=2e-3), "mismatch vs reference (B=20)"

    # --- bf16 operands + bf16 output (bandwidth-saving serving path), f32 accumulation. ---
    x_bf = x2.astype(jnp.bfloat16)
    w_bf = w_t.astype(jnp.bfloat16)
    out_bf = jax.block_until_ready(header_forward(x_bf, w_bf, out_dtype=jnp.bfloat16))
    ref_bf = header_reference(x_bf, w_bf)
    assert out_bf.shape == (B2, OUT_FEATURES) and out_bf.dtype == jnp.bfloat16
    assert jnp.allclose(out_bf.astype(jnp.float32), ref_bf, atol=2e-2, rtol=2e-2), \
        "mismatch vs reference (bf16)"

    print("KERNEL_OK")
</pallas_src>

<mosaic_0001>
module attributes {stable_mosaic.version = 11 : i64} {
  func.func @header_kernel(%arg0: i32, %arg1: memref<8x256xf32, #tpu.memory_space<vmem>>, %arg2: memref<256x512xf32, #tpu.memory_space<vmem>>, %arg3: memref<8x512xf32, #tpu.memory_space<vmem>>) attributes {dimension_semantics = [#tpu.dimension_semantics<parallel>], iteration_bounds = array<i64: 1>, scalar_prefetch = 0 : i64, scratch_operands = 0 : i64, tpu.core_type = #tpu.core_type<tc>, window_params = [{transform_indices = @transform_0, window_bounds = array<i64: 8, 256>}, {pipeline_mode = #tpu.pipeline_mode<synchronous>, transform_indices = @transform_1, window_bounds = array<i64: 256, 512>}, {transform_indices = @transform_2, window_bounds = array<i64: 8, 512>}]} {
    %c0 = arith.constant 0 : index
    %c0_0 = arith.constant 0 : index
    %0 = vector.load %arg1[%c0, %c0_0] : memref<8x256xf32, #tpu.memory_space<vmem>>, vector<8x256xf32>
    %c0_1 = arith.constant 0 : index
    %c0_2 = arith.constant 0 : index
    %1 = vector.load %arg2[%c0_1, %c0_2] : memref<256x512xf32, #tpu.memory_space<vmem>>, vector<256x512xf32>
    %cst = arith.constant dense<0.000000e+00> : vector<8x512xf32>
    %2 = tpu.matmul %0, %1, %cst {dimension_numbers = #tpu.dot_dimension_numbers<[1], [0], [0], [1], [0, 0, 1, 1], [], []>} : vector<8x256xf32>, vector<256x512xf32>, vector<8x512xf32> -> vector<8x512xf32>
    %3 = arith.mulf %2, %2 : vector<8x512xf32>
    %cst_3 = arith.constant dense<0.000000e+00> : vector<8xf32>
    %4 = vector.multi_reduction <add>, %3, %cst_3 [1] : vector<8x512xf32> to vector<8xf32>
    %5 = vector.shape_cast %4 : vector<8xf32> to vector<8x1xf32>
    %cst_4 = arith.constant 1.000000e-24 : f32
    %6 = vector.broadcast %cst_4 : f32 to vector<8x1xf32>
    %7 = arith.maximumf %5, %6 : vector<8x1xf32>
    %8 = math.rsqrt %7 : vector<8x1xf32>
    %9 = vector.broadcast %8 : vector<8x1xf32> to vector<8x512xf32>
    %10 = arith.mulf %2, %9 : vector<8x512xf32>
    %c0_5 = arith.constant 0 : index
    %c0_6 = arith.constant 0 : index
    %11 = vector.load %arg3[%c0_5, %c0_6] : memref<8x512xf32, #tpu.memory_space<vmem>>, vector<8x512xf32>
    tpu.vector_store %arg3[%c0_5, %c0_6], %10 {strides = array<i32>} : memref<8x512xf32, #tpu.memory_space<vmem>>, vector<8x512xf32>,
    return
  }
  func.func @transform_0(%arg0: i32) -> (i32, i32) {
    %c0_i32 = arith.constant 0 : i32
    %c0_i32_0 = arith.constant 0 : i32
    return %arg0, %c0_i32 : i32, i32
  }
  func.func @transform_1(%arg0: i32) -> (i32, i32) {
    %c0_i32 = arith.constant 0 : i32
    %c0_i32_0 = arith.constant 0 : i32
    %c0_i32_1 = arith.constant 0 : i32
    return %c0_i32, %c0_i32_0 : i32, i32
  }
  func.func @transform_2(%arg0: i32) -> (i32, i32) {
    %c0_i32 = arith.constant 0 : i32
    %c0_i32_0 = arith.constant 0 : i32
    return %arg0, %c0_i32 : i32, i32
  }
}

</mosaic_0001>

<llo_original>
// kernel: tpu_custom_call.1
$region0: #{tpu_custom_call.1}
  #allocation0 [shape = 'u32[]', space=smem, size = 0x4, offset = 0x4, fixed_abs, tag = 'smem constant byte address 0x4 - core index']
  #allocation1 [shape = 'u32[144,128]{1,0:T(1,128)}', space=vmem, size = 0x12000, scoped, tag = 'internal scratch']
  %s0 = inlined_call_operand.hbm [shape: f32[8,256], index: 0, kind: input, shape index: {}]
  %s1 = inlined_call_operand.hbm [shape: f32[256,512], index: 1, kind: input, shape index: {}]
  %s2 = inlined_call_operand.hbm [shape: f32[8,512], index: 2, kind: output, shape index: {}]
  %s3 = sld [smem:[#allocation0]]
  $region26: #{tpu_custom_call.1} parent=0
    _
  %s5 = ssub.s32 1, %s3
  %s6 = scalar_select 0, %s5, %s3
  $region1: #{tpu_custom_call.1} parent=0
    #allocation2 [shape = 'u8[8192]{0}', space=vmem, size = 0x2000, scoped, tag = 'input window, operand 0, single buffered']
    #allocation3 [shape = 's32[1]{0}', space=sflag, size = 0x4, scoped, tag = 'scoped memory for tpu_custom_call.1']
    #allocation4 [shape = 's32[1]{0}', space=sflag, size = 0x4, scoped, tag = 'scoped memory for tpu_custom_call.1']
    #allocation5 [shape = 'u8[524288]{0}', space=vmem, size = 0x80000, scoped, tag = 'input window, operand 1, single buffered']
    #allocation6 [shape = 's32[1]{0}', space=sflag, size = 0x4, scoped, tag = 'scoped memory for tpu_custom_call.1']
    #allocation7 [shape = 'u8[16384]{0}', space=vmem, size = 0x4000, scoped, tag = 'output window, operand 0, single buffered']
    %7 = vsyncpa [#allocation3], 0
    %8 = vsyncpa [#allocation6], 0
    %9 = vsyncpa [#allocation4], 0
    // Predicated region
    $region2: #{tpu_custom_call.1} parent=1 // pred_check
      _
    $region3: #{tpu_custom_call.1} parent=1 // pred_check_branch
      %11 = sbr.rel (0) target = $region5
    $region4: #{tpu_custom_call.1} parent=1 // pred_region
      %s13 = ssub.s32 256, 256
      %14 = vsyncadd [#allocation3], %s13
      %s16 = sshll.u32 [#allocation2], 4
      %s17 = int_to_ptr.vmem [resolvable:$true] %s16
      %19 = dma.hbm_to_vmem [thread:$0]  %s0, 256, %s17, [#allocation3]
    $region5: #{tpu_custom_call.1} parent=1 // pred_fallthru
      _
    // Predicated region
    $region6: #{tpu_custom_call.1} parent=1 // pred_check
      _
    $region7: #{tpu_custom_call.1} parent=1 // pred_check_branch
      %21 = sbr.rel (0) target = $region9
    $region8: #{tpu_custom_call.1} parent=1 // pred_region
      %s23 = ssub.s32 16384, 16384
      %24 = vsyncadd [#allocation6], %s23
      %s25 = sshll.u32 [#allocation5], 4
      %s26 = int_to_ptr.vmem [resolvable:$true] %s25
      %31 = dma.hbm_to_vmem [thread:$0]  %s1, 16384, %s26, [#allocation6], 512, 512, 32
    $region9: #{tpu_custom_call.1} parent=1 // pred_fallthru
      _
    // Predicated region
    $region10: #{tpu_custom_call.1} parent=1 // pred_check
      _
    $region11: #{tpu_custom_call.1} parent=1 // pred_check_branch
      %33 = sbr.rel (0) target = $region13
    $region12: #{tpu_custom_call.1} parent=1 // pred_region
      %34 = dma.done [#allocation3], 256
    $region13: #{tpu_custom_call.1} parent=1 // pred_fallthru
      _
    // Predicated region
    $region14: #{tpu_custom_call.1} parent=1 // pred_check
      _
    $region15: #{tpu_custom_call.1} parent=1 // pred_check_branch
      %36 = sbr.rel (0) target = $region17
    $region16: #{tpu_custom_call.1} parent=1 // pred_region
      %37 = dma.done [#allocation6], 16384
    $region17: #{tpu_custom_call.1} parent=1 // pred_fallthru
      _
    %v38 = vld [vmem:[#allocation2] sm:$0xff]
    %v39 = vld [vmem:[#allocation2 + $0x8] sm:$0xff]
    %v40 = vld [vmem:[#allocation5] sm:$0xff]
    %v41 = vld [vmem:[#allocation5 + $0x8] sm:$0xff]
    %v42 = vld [vmem:[#allocation5 + $0x10] sm:$0xff]
    %v43 = vld [vmem:[#allocation5 + $0x18] sm:$0xff]
    %v44 = vld [vmem:[#allocation5 + $0x20] sm:$0xff]
    %v45 = vld [vmem:[#allocation5 + $0x28] sm:$0xff]
    %v46 = vld [vmem:[#allocation5 + $0x30] sm:$0xff]
    %v47 = vld [vmem:[#allocation5 + $0x38] sm:$0xff]
    %v48 = vld [vmem:[#allocation5 + $0x40] sm:$0xff]
    %v49 = vld [vmem:[#allocation5 + $0x48] sm:$0xff]
    %v50 = vld [vmem:[#allocation5 + $0x50] sm:$0xff]
    %v51 = vld [vmem:[#allocation5 + $0x58] sm:$0xff]
    %v52 = vld [vmem:[#allocation5 + $0x60] sm:$0xff]
    %v53 = vld [vmem:[#allocation5 + $0x68] sm:$0xff]
    %v54 = vld [vmem:[#allocation5 + $0x70] sm:$0xff]
    %v55 = vld [vmem:[#allocation5 + $0x78] sm:$0xff]
    %v56 = vld [vmem:[#allocation5 + $0x80] sm:$0xff]
    %v57 = vld [vmem:[#allocation5 + $0x88] sm:$0xff]
    %v58 = vld [vmem:[#allocation5 + $0x90] sm:$0xff]
    %v59 = vld [vmem:[#allocation5 + $0x98] sm:$0xff]
    %v60 = vld [vmem:[#allocation5 + $0xa0] sm:$0xff]
    %v61 = vld [vmem:[#allocation5 + $0xa8] sm:$0xff]
    %v62 = vld [vmem:[#allocation5 + $0xb0] sm:$0xff]
    %v63 = vld [vmem:[#allocation5 + $0xb8] sm:$0xff]
    %v64 = vld [vmem:[#allocation5 + $0xc0] sm:$0xff]
    %v65 = vld [vmem:[#allocation5 + $0xc8] sm:$0xff]
    %v66 = vld [vmem:[#allocation5 + $0xd0] sm:$0xff]
    %v67 = vld [vmem:[#allocation5 + $0xd8] sm:$0xff]
    %v68 = vld [vmem:[#allocation5 + $0xe0] sm:$0xff]
    %v69 = vld [vmem:[#allocation5 + $0xe8] sm:$0xff]
    %v70 = vld [vmem:[#allocation5 + $0xf0] sm:$0xff]
    %v71 = vld [vmem:[#allocation5 + $0xf8] sm:$0xff]
    %v72 = vld [vmem:[#allocation5 + $0x100] sm:$0xff]
    %v73 = vld [vmem:[#allocation5 + $0x108] sm:$0xff]
    %v74 = vld [vmem:[#allocation5 + $0x110] sm:$0xff]
    %v75 = vld [vmem:[#allocation5 + $0x118] sm:$0xff]
    %v76 = vld [vmem:[#allocation5 + $0x120] sm:$0xff]
    %v77 = vld [vmem:[#allocation5 + $0x128] sm:$0xff]
    %v78 = vld [vmem:[#allocation5 + $0x130] sm:$0xff]
    %v79 = vld [vmem:[#allocation5 + $0x138] sm:$0xff]
    %v80 = vld [vmem:[#allocation5 + $0x140] sm:$0xff]
    %v81 = vld [vmem:[#allocation5 + $0x148] sm:$0xff]
    %v82 = vld [vmem:[#allocation5 + $0x150] sm:$0xff]
    %v83 = vld [vmem:[#allocation5 + $0x158] sm:$0xff]
    %v84 = vld [vmem:[#allocation5 + $0x160] sm:$0xff]
    %v85 = vld [vmem:[#allocation5 + $0x168] sm:$0xff]
    %v86 = vld [vmem:[#allocation5 + $0x170] sm:$0xff]
    %v87 = vld [vmem:[#allocation5 + $0x178] sm:$0xff]
    %v88 = vld [vmem:[#allocation5 + $0x180] sm:$0xff]
    %v89 = vld [vmem:[#allocation5 + $0x188] sm:$0xff]
    %v90 = vld [vmem:[#allocation5 + $0x190] sm:$0xff]
    %v91 = vld [vmem:[#allocation5 + $0x198] sm:$0xff]
    %v92 = vld [vmem:[#allocation5 + $0x1a0] sm:$0xff]
    %v93 = vld [vmem:[#allocation5 + $0x1a8] sm:$0xff]
    %v94 = vld [vmem:[#allocation5 + $0x1b0] sm:$0xff]
    %v95 = vld [vmem:[#allocation5 + $0x1b8] sm:$0xff]
    %v96 = vld [vmem:[#allocation5 + $0x1c0] sm:$0xff]
    %v97 = vld [vmem:[#allocation5 + $0x1c8] sm:$0xff]
    %v98 = vld [vmem:[#allocation5 + $0x1d0] sm:$0xff]
    %v99 = vld [vmem:[#allocation5 + $0x1d8] sm:$0xff]
    %v100 = vld [vmem:[#allocation5 + $0x1e0] sm:$0xff]
    %v101 = vld [vmem:[#allocation5 + $0x1e8] sm:$0xff]
    %v102 = vld [vmem:[#allocation5 + $0x1f0] sm:$0xff]
    %v103 = vld [vmem:[#allocation5 + $0x1f8] sm:$0xff]
    %v104 = vld [vmem:[#allocation5 + $0x200] sm:$0xff]
    %v105 = vld [vmem:[#allocation5 + $0x208] sm:$0xff]
    %v106 = vld [vmem:[#allocation5 + $0x210] sm:$0xff]
    %v107 = vld [vmem:[#allocation5 + $0x218] sm:$0xff]
    %v108 = vld [vmem:[#allocation5 + $0x220] sm:$0xff]
    %v109 = vld [vmem:[#allocation5 + $0x228] sm:$0xff]
    %v110 = vld [vmem:[#allocation5 + $0x230] sm:$0xff]
    %v111 = vld [vmem:[#allocation5 + $0x238] sm:$0xff]
    %v112 = vld [vmem:[#allocation5 + $0x240] sm:$0xff]
    %v113 = vld [vmem:[#allocation5 + $0x248] sm:$0xff]
    %v114 = vld [vmem:[#allocation5 + $0x250] sm:$0xff]
    %v115 = vld [vmem:[#allocation5 + $0x258] sm:$0xff]
    %v116 = vld [vmem:[#allocation5 + $0x260] sm:$0xff]
    %v117 = vld [vmem:[#allocation5 + $0x268] sm:$0xff]
    %v118 = vld [vmem:[#allocation5 + $0x270] sm:$0xff]
    %v119 = vld [vmem:[#allocation5 + $0x278] sm:$0xff]
    %v120 = vld [vmem:[#allocation5 + $0x280] sm:$0xff]
    %v121 = vld [vmem:[#allocation5 + $0x288] sm:$0xff]
    %v122 = vld [vmem:[#allocation5 + $0x290] sm:$0xff]
    %v123 = vld [vmem:[#allocation5 + $0x298] sm:$0xff]
    %v124 = vld [vmem:[#allocation5 + $0x2a0] sm:$0xff]
    %v125 = vld [vmem:[#allocation5 + $0x2a8] sm:$0xff]
    %v126 = vld [vmem:[#allocation5 + $0x2b0] sm:$0xff]
    %v127 = vld [vmem:[#allocation5 + $0x2b8] sm:$0xff]
    %v128 = vld [vmem:[#allocation5 + $0x2c0] sm:$0xff]
    %v129 = vld [vmem:[#allocation5 + $0x2c8] sm:$0xff]
    %v130 = vld [vmem:[#allocation5 + $0x2d0] sm:$0xff]
    %v131 = vld [vmem:[#allocation5 + $0x2d8] sm:$0xff]
    %v132 = vld [vmem:[#allocation5 + $0x2e0] sm:$0xff]
    %v133 = vld [vmem:[#allocation5 + $0x2e8] sm:$0xff]
    %v134 = vld [vmem:[#allocation5 + $0x2f0] sm:$0xff]
    %v135 = vld [vmem:[#allocation5 + $0x2f8] sm:$0xff]
    %v136 = vld [vmem:[#allocation5 + $0x300] sm:$0xff]
    %v137 = vld [vmem:[#allocation5 + $0x308] sm:$0xff]
    %v138 = vld [vmem:[#allocation5 + $0x310] sm:$0xff]
    %v139 = vld [vmem:[#allocation5 + $0x318] sm:$0xff]
    %v140 = vld [vmem:[#allocation5 + $0x320] sm:$0xff]
    %v141 = vld [vmem:[#allocation5 + $0x328] sm:$0xff]
    %v142 = vld [vmem:[#allocation5 + $0x330] sm:$0xff]
    %v143 = vld [vmem:[#allocation5 + $0x338] sm:$0xff]
    %v144 = vld [vmem:[#allocation5 + $0x340] sm:$0xff]
    %v145 = vld [vmem:[#allocation5 + $0x348] sm:$0xff]
    %v146 = vld [vmem:[#allocation5 + $0x350] sm:$0xff]
    %v147 = vld [vmem:[#allocation5 + $0x358] sm:$0xff]
    %v148 = vld [vmem:[#allocation5 + $0x360] sm:$0xff]
    %v149 = vld [vmem:[#allocation5 + $0x368] sm:$0xff]
    %v150 = vld [vmem:[#allocation5 + $0x370] sm:$0xff]
    %v151 = vld [vmem:[#allocation5 + $0x378] sm:$0xff]
    %v152 = vld [vmem:[#allocation5 + $0x380] sm:$0xff]
    %v153 = vld [vmem:[#allocation5 + $0x388] sm:$0xff]
    %v154 = vld [vmem:[#allocation5 + $0x390] sm:$0xff]
    %v155 = vld [vmem:[#allocation5 + $0x398] sm:$0xff]
    %v156 = vld [vmem:[#allocation5 + $0x3a0] sm:$0xff]
    %v157 = vld [vmem:[#allocation5 + $0x3a8] sm:$0xff]
    %v158 = vld [vmem:[#allocation5 + $0x3b0] sm:$0xff]
    %v159 = vld [vmem:[#allocation5 + $0x3b8] sm:$0xff]
    %v160 = vld [vmem:[#allocation5 + $0x3c0] sm:$0xff]
    %v161 = vld [vmem:[#allocation5 + $0x3c8] sm:$0xff]
    %v162 = vld [vmem:[#allocation5 + $0x3d0] sm:$0xff]
    %v163 = vld [vmem:[#allocation5 + $0x3d8] sm:$0xff]
    %v164 = vld [vmem:[#allocation5 + $0x3e0] sm:$0xff]
    %v165 = vld [vmem:[#allocation5 + $0x3e8] sm:$0xff]
    %v166 = vld [vmem:[#allocation5 + $0x3f0] sm:$0xff]
    %v167 = vld [vmem:[#allocation5 + $0x3f8] sm:$0xff]
    %168 = vmatprep.subr.mxu0 %v41
    %169 = vmatpush1.msra.mxu0 %v40
    %170 = vmatprep.subr.mxu0 %v45
    %171 = vmatpush1.msra.mxu0 %v44
    %172 = vmatprep.subr.mxu0 %v49
    %173 = vmatpush1.msra.mxu0 %v48
    %174 = vmatprep.subr.mxu0 %v53
    %175 = vmatpush1.msra.mxu0 %v52
    %176 = vmatprep.subr.mxu0 %v57
    %177 = vmatpush1.msra.mxu0 %v56
    %178 = vmatprep.subr.mxu0 %v61
    %179 = vmatpush1.msra.mxu0 %v60
    %180 = vmatprep.subr.mxu0 %v65
    %181 = vmatpush1.msra.mxu0 %v64
    %182 = vmatprep.subr.mxu0 %v69
    %183 = vmatpush1.msra.mxu0 %v68
    %184 = vmatprep.subr.mxu0 %v73
    %185 = vmatpush1.msra.mxu0 %v72
    %186 = vmatprep.subr.mxu0 %v77
    %187 = vmatpush1.msra.mxu0 %v76
    %188 = vmatprep.subr.mxu0 %v81
    %189 = vmatpush1.msra.mxu0 %v80
    %190 = vmatprep.subr.mxu0 %v85
    %191 = vmatpush1.msra.mxu0 %v84
    %192 = vmatprep.subr.mxu0 %v89
    %193 = vmatpush1.msra.mxu0 %v88
    %194 = vmatprep.subr.mxu0 %v93
    %195 = vmatpush1.msra.mxu0 %v92
    %196 = vmatprep.subr.mxu0 %v97
    %197 = vmatpush1.msra.mxu0 %v96
    %198 = vmatprep.subr.mxu0 %v101
    %199 = vmatpush1.msra.mxu0 %v100
    %200 = vmatprep.subr.mxu0 %v105
    %201 = vmatpush1.msra.mxu0 %v104
    %202 = vmatprep.subr.mxu0 %v109
    %203 = vmatpush1.msra.mxu0 %v108
    %204 = vmatprep.subr.mxu0 %v113
    %205 = vmatpush1.msra.mxu0 %v112
    %206 = vmatprep.subr.mxu0 %v117
    %207 = vmatpush1.msra.mxu0 %v116
    %208 = vmatprep.subr.mxu0 %v121
    %209 = vmatpush1.msra.mxu0 %v120
    %210 = vmatprep.subr.mxu0 %v125
    %211 = vmatpush1.msra.mxu0 %v124
    %212 = vmatprep.subr.mxu0 %v129
    %213 = vmatpush1.msra.mxu0 %v128
    %214 = vmatprep.subr.mxu0 %v133
    %215 = vmatpush1.msra.mxu0 %v132
    %216 = vmatprep.subr.mxu0 %v137
    %217 = vmatpush1.msra.mxu0 %v136
    %218 = vmatprep.subr.mxu0 %v141
    %219 = vmatpush1.msra.mxu0 %v140
    %220 = vmatprep.subr.mxu0 %v145
    %221 = vmatpush1.msra.mxu0 %v144
    %222 = vmatprep.subr.mxu0 %v149
    %223 = vmatpush1.msra.mxu0 %v148
    %224 = vmatprep.subr.mxu0 %v153
    %225 = vmatpush1.msra.mxu0 %v152
    %226 = vmatprep.subr.mxu0 %v157
    %227 = vmatpush1.msra.mxu0 %v156
    %228 = vmatprep.subr.mxu0 %v161
    %229 = vmatpush1.msra.mxu0 %v160
    %230 = vmatprep.subr.mxu0 %v165
    %231 = vmatpush1.msra.mxu0 %v164
    %232 = vmatprep.mubr.f32.mxu0 %v39
    %233 = vmatmul.mubr.f32.gmra.mrb[0].mxu0 %v38
    %v234 = vpop.f32.mrb[0].mxu0
    %v235 = vadd.f32 0.0, %v234
    %v236 = vpop.f32.mrb[0].mxu0
    %v237 = vadd.f32 0.0, %v236
    %238 = vdwg.mxu0
    %239 = vmatprep.subr.mxu0 %v43
    %240 = vmatpush1.msra.mxu0 %v42
    %241 = vmatprep.subr.mxu0 %v47
    %242 = vmatpush1.msra.mxu0 %v46
    %243 = vmatprep.subr.mxu0 %v51
    %244 = vmatpush1.msra.mxu0 %v50
    %245 = vmatprep.subr.mxu0 %v55
    %246 = vmatpush1.msra.mxu0 %v54
    %247 = vmatprep.subr.mxu0 %v59
    %248 = vmatpush1.msra.mxu0 %v58
    %249 = vmatprep.subr.mxu0 %v63
    %250 = vmatpush1.msra.mxu0 %v62
    %251 = vmatprep.subr.mxu0 %v67
    %252 = vmatpush1.msra.mxu0 %v66
    %253 = vmatprep.subr.mxu0 %v71
    %254 = vmatpush1.msra.mxu0 %v70
    %255 = vmatprep.subr.mxu0 %v75
    %256 = vmatpush1.msra.mxu0 %v74
    %257 = vmatprep.subr.mxu0 %v79
    %258 = vmatpush1.msra.mxu0 %v78
    %259 = vmatprep.subr.mxu0 %v83
    %260 = vmatpush1.msra.mxu0 %v82
    %261 = vmatprep.subr.mxu0 %v87
    %262 = vmatpush1.msra.mxu0 %v86
    %263 = vmatprep.subr.mxu0 %v91
    %264 = vmatpush1.msra.mxu0 %v90
    %265 = vmatprep.subr.mxu0 %v95
    %266 = vmatpush1.msra.mxu0 %v94
    %267 = vmatprep.subr.mxu0 %v99
    %268 = vmatpush1.msra.mxu0 %v98
    %269 = vmatprep.subr.mxu0 %v103
    %270 = vmatpush1.msra.mxu0 %v102
    %271 = vmatprep.subr.mxu0 %v107
    %272 = vmatpush1.msra.mxu0 %v106
    %273 = vmatprep.subr.mxu0 %v111
    %274 = vmatpush1.msra.mxu0 %v110
    %275 = vmatprep.subr.mxu0 %v115
    %276 = vmatpush1.msra.mxu0 %v114
    %277 = vmatprep.subr.mxu0 %v119
    %278 = vmatpush1.msra.mxu0 %v118
    %279 = vmatprep.subr.mxu0 %v123
    %280 = vmatpush1.msra.mxu0 %v122
    %281 = vmatprep.subr.mxu0 %v127
    %282 = vmatpush1.msra.mxu0 %v126
    %283 = vmatprep.subr.mxu0 %v131
    %284 = vmatpush1.msra.mxu0 %v130
    %285 = vmatprep.subr.mxu0 %v135
    %286 = vmatpush1.msra.mxu0 %v134
    %287 = vmatprep.subr.mxu0 %v139
    %288 = vmatpush1.msra.mxu0 %v138
    %289 = vmatprep.subr.mxu0 %v143
    %290 = vmatpush1.msra.mxu0 %v142
    %291 = vmatprep.subr.mxu0 %v147
    %292 = vmatpush1.msra.mxu0 %v146
    %293 = vmatprep.subr.mxu0 %v151
    %294 = vmatpush1.msra.mxu0 %v150
    %295 = vmatprep.subr.mxu0 %v155
    %296 = vmatpush1.msra.mxu0 %v154
    %297 = vmatprep.subr.mxu0 %v159
    %298 = vmatpush1.msra.mxu0 %v158
    %299 = vmatprep.subr.mxu0 %v163
    %300 = vmatpush1.msra.mxu0 %v162
    %301 = vmatprep.subr.mxu0 %v167
    %302 = vmatpush1.msra.mxu0 %v166
    %303 = vmatprep.mubr.f32.mxu0 %v39
    %304 = vmatmul.mubr.f32.gmra.mrb[0].mxu0 %v38
    %v305 = vpop.f32.mrb[0].mxu0
    %v306 = vadd.f32 0.0, %v305
    %v307 = vpop.f32.mrb[0].mxu0
    %v308 = vadd.f32 0.0, %v307
    %309 = vdwg.mxu0
    %v310 = vmul.f32 %v235, %v235
    %v311 = vmul.f32 %v237, %v237
    %v312 = vmul.f32 %v306, %v306
    %v313 = vmul.f32 %v308, %v308
    %v314 = vadd.f32 %v310, %v311
    %v315 = vadd.f32 %v314, %v312
    %v316 = vadd.f32 %v315, %v313
    %317 = vadd.xlane.f32.xlu0 %v316
    %v318 = vpop.xlane.xlu0 %317
    %v319 = vmax.f32 %v318, 1e-24
    %v320 = vrsqrt.pop %v319
    %v321 = vmul.f32 %v235, %v320
    %v322 = vmul.f32 %v237, %v320
    %v323 = vmul.f32 %v306, %v320
    %v324 = vmul.f32 %v308, %v320
    %325 = vst [vmem:[#allocation7] sm:$0xff] %v321
    %326 = vst [vmem:[#allocation7 + $0x8] sm:$0xff] %v322
    %327 = vst [vmem:[#allocation7 + $0x10] sm:$0xff] %v323
    %328 = vst [vmem:[#allocation7 + $0x18] sm:$0xff] %v324
    // Predicated region
    $region18: #{tpu_custom_call.1} parent=1 // pred_check
      _
    $region19: #{tpu_custom_call.1} parent=1 // pred_check_branch
      %330 = sbr.rel (0) target = $region21
    $region20: #{tpu_custom_call.1} parent=1 // pred_region
      %s332 = ssub.s32 512, 512
      %333 = vsyncadd [#allocation4], %s332
      %s335 = sshll.u32 [#allocation7], 4
      %s336 = int_to_ptr.vmem [resolvable:$true] %s335
      %338 = dma.vmem_to_hbm [thread:$0]  %s336, 512, %s2, [#allocation4]
    $region21: #{tpu_custom_call.1} parent=1 // pred_fallthru
      _
    // Predicated region
    $region22: #{tpu_custom_call.1} parent=1 // pred_check
      _
    $region23: #{tpu_custom_call.1} parent=1 // pred_check_branch
      %340 = sbr.rel (0) target = $region25
    $region24: #{tpu_custom_call.1} parent=1 // pred_region
      %341 = dma.done [#allocation4], 512
    $region25: #{tpu_custom_call.1} parent=1 // pred_fallthru
      _
    %342 = vsyncpa [#allocation3], 1
    %343 = vsyncpa [#allocation6], 1
    %344 = vsyncpa [#allocation4], 1

</llo_original>
